<compile_context>
chip_gen: v7x
topology: tpu7x:2x2x1
jax: 0.10.0
libtpu: 0.0.40
codegen_flags: <defaults>
</compile_context>

<pallas_src>
import numpy as np
import jax
import jax.numpy as jnp
from jax.experimental import pallas as pl
from jax.experimental.pallas import tpu as pltpu

_LANES = 128


def _round_up(x: int, m: int) -> int:
    return ((x + m - 1) // m) * m


def _make_nll_kernel(num_bins: int, tolerance: float, block_rows: int, n_valid: int):
    tol = float(tolerance)            # Python floats/ints only -> literals
    one_m_tol = 1.0 - tol
    block_rows = int(block_rows)
    n_valid = int(n_valid)

    def kernel(bins_ref, pred_ref, t_ref, ind_ref, out_ref):
        # bins_ref : SMEM [2, B]        (row 0: starts, row 1: 1/length)
        # pred_ref : VMEM [B, tr, 128]  (predictions, samples on (sublane,lane))
        # t_ref    : VMEM [tr, 128]     (event times)
        # ind_ref  : VMEM [tr, 128]     (event indicators)
        # out_ref  : VMEM [1, 1, 128]   (this tile's lane-wise partial sums)
        i = pl.program_id(0)
        t = t_ref[...]
        ind = ind_ref[...]

        ev = jnp.zeros(t.shape, jnp.float32)
        nev = jnp.zeros(t.shape, jnp.float32)

        # Unrolled over the (small) bin axis; each iteration is a handful of
        # lane-dense VPU ops on one [tr, 128] prediction slab.
        for bi in range(num_bins):
            p = jnp.clip(pred_ref[bi].astype(jnp.float32), tol, one_m_tol)
            s = bins_ref[0, bi]                       # scalars from SMEM
            il = bins_ref[1, bi]
            prop = (t - s) * il                       # (t - start) / length
            # event mask (t > start) & (t <= end) == (prop > 0) & (prop <= 1)
            in_bin = jnp.logical_and(prop > 0.0, prop <= 1.0)
            ev = ev + jnp.where(in_bin, p, 0.0)
            nev = nev + jnp.clip(prop, 0.0, 1.0) * p

        ev = jnp.clip(ev + tol, tol, one_m_tol)
        nev = jnp.clip(1.0 - nev + tol, tol, one_m_tol)

        # Faithful to the reference (supports fractional indicators); both
        # logs go to the EUP slot, which has slack under the VALU work.
        ll = ind * jnp.log(ev) + (1.0 - ind) * jnp.log(nev)    # [tr, 128]

        last = pl.num_programs(0) - 1

        @pl.when(i != last)
        def _full_tile():
            out_ref[...] = jnp.sum(ll, axis=0).reshape(1, 1, _LANES)

        @pl.when(i == last)
        def _tail_tile():
            # Mask padded samples (only ever present in the last tile).
            rows = jax.lax.broadcasted_iota(jnp.int32, ll.shape, 0)
            lanes = jax.lax.broadcasted_iota(jnp.int32, ll.shape, 1)
            gidx = (i * block_rows + rows) * _LANES + lanes
            masked = jnp.where(gidx < n_valid, ll, 0.0)
            out_ref[...] = jnp.sum(masked, axis=0).reshape(1, 1, _LANES)

    return kernel


def discrete_failure_time_nll(predictions, event_indicators, event_times,
                              bin_boundaries, tolerance=1e-7, block_rows=None):
    """predictions: [N, B] float, event_indicators/event_times: [N] float,
    bin_boundaries: [B+1] float. Returns scalar float32 NLL (mean over N)."""
    predictions = jnp.asarray(predictions, jnp.float32)
    n, b = predictions.shape

    # Bin constants -> one small [2, B] SMEM slab (start, 1/length).
    bb = jnp.asarray(bin_boundaries, jnp.float32)
    starts = bb[:-1]
    inv_len = 1.0 / (bb[1:] - starts)
    bins = jnp.stack([starts, inv_len], axis=0)                # [2, B]

    # Samples packed onto a (rows, 128-lane) plane; block_rows rows per step.
    groups = max(1, -(-n // _LANES))                           # ceil(n / 128)
    if block_rows is None:
        # Single tile for small batches; 512-row (~2 MiB pred) tiles otherwise.
        block_rows = min(512, _round_up(groups, 8))
    block_rows = max(8, min(2048, _round_up(block_rows, 8)))   # v7x VMEM cap
    groups_pad = _round_up(groups, block_rows)                 # pad < 1 tile
    n_pad = groups_pad * _LANES
    num_tiles = groups_pad // block_rows

    # Layout plumbing (the only wrapper-side passes over the data).
    pred_t = jnp.pad(predictions.T, ((0, 0), (0, n_pad - n)))
    pred_t = pred_t.reshape(b, groups_pad, _LANES)             # [B, R, 128]
    times = jnp.pad(jnp.asarray(event_times, jnp.float32).reshape(-1),
                    (0, n_pad - n)).reshape(groups_pad, _LANES)
    inds = jnp.pad(jnp.asarray(event_indicators, jnp.float32).reshape(-1),
                   (0, n_pad - n)).reshape(groups_pad, _LANES)

    partials = pl.pallas_call(
        _make_nll_kernel(b, float(tolerance), block_rows, n),
        out_shape=jax.ShapeDtypeStruct((num_tiles, 1, _LANES), jnp.float32),
        grid=(num_tiles,),
        in_specs=[
            pl.BlockSpec(memory_space=pltpu.MemorySpace.SMEM),            # bins
            pl.BlockSpec((b, block_rows, _LANES), lambda i: (0, i, 0)),   # preds
            pl.BlockSpec((block_rows, _LANES), lambda i: (i, 0)),         # times
            pl.BlockSpec((block_rows, _LANES), lambda i: (i, 0)),         # inds
        ],
        out_specs=pl.BlockSpec((1, 1, _LANES), lambda i: (i, 0, 0)),
        compiler_params=pltpu.CompilerParams(
            dimension_semantics=("parallel",),        # independent tiles
            vmem_limit_bytes=32 * 1024 * 1024,        # safe on v5e/v6e/v7x
        ),
    )(bins, pred_t, times, inds)

    # Final scalar sum / mean / negation (trivial; everything hot is in-kernel).
    return -jnp.sum(partials) / n


def _reference_nll(predictions, event_indicators, event_times, bin_boundaries,
                   tolerance=1e-7):
    bb = jnp.asarray(bin_boundaries, jnp.float32)
    starts, ends = bb[:-1], bb[1:]
    lengths = ends - starts
    p = jnp.clip(jnp.asarray(predictions, jnp.float32), tolerance, 1 - tolerance)
    t = jnp.asarray(event_times, jnp.float32)[:, None]
    disc = ((t > starts[None, :]) & (t <= ends[None, :])).astype(jnp.float32)
    ev = jnp.sum(disc * p, axis=-1) + tolerance
    prop = jnp.clip((t - starts[None, :]) / lengths[None, :], 0.0, 1.0)
    nonev = 1 - jnp.sum(prop * p, axis=-1) + tolerance
    ev = jnp.clip(ev, tolerance, 1 - tolerance)
    nonev = jnp.clip(nonev, tolerance, 1 - tolerance)
    ind = jnp.asarray(event_indicators, jnp.float32)
    ll = ind * jnp.log(ev) + (1 - ind) * jnp.log(nonev)
    return -jnp.mean(ll)


if __name__ == "__main__":
    key = jax.random.PRNGKey(0)

    NUM_BINS = 8
    bin_boundaries = np.linspace(0.0, float(NUM_BINS), NUM_BINS + 1,
                                 dtype=np.float32)

    k1, k2, k3, k4, k5, k6 = jax.random.split(key, 6)

    # --- Test 1: small batch (module's typical call shape); single tile. ---
    N1 = 8
    preds1 = jax.nn.softmax(jax.random.normal(k1, (N1, NUM_BINS),
                                              dtype=jnp.float32), axis=-1)
    inds1 = (jax.random.uniform(k2, (N1,)) > 0.5).astype(jnp.float32)
    times1 = jax.random.uniform(k3, (N1,), minval=0.1, maxval=7.9,
                                dtype=jnp.float32)

    loss1 = jax.block_until_ready(
        discrete_failure_time_nll(preds1, inds1, times1, bin_boundaries))
    ref1 = _reference_nll(preds1, inds1, times1, bin_boundaries)
    assert np.allclose(np.asarray(loss1), np.asarray(ref1),
                       rtol=1e-5, atol=1e-5), (loss1, ref1)

    # --- Test 2: larger, non-multiple-of-128 batch; default (single big tile)
    # path with tail masking. ---
    N2 = 2500
    preds2 = jax.nn.softmax(jax.random.normal(k4, (N2, NUM_BINS),
                                              dtype=jnp.float32), axis=-1)
    inds2 = (jax.random.uniform(k5, (N2,)) > 0.5).astype(jnp.float32)
    times2 = jax.random.uniform(k6, (N2,), minval=0.1, maxval=7.9,
                                dtype=jnp.float32)

    loss2 = jax.block_until_ready(
        discrete_failure_time_nll(preds2, inds2, times2, bin_boundaries))
    ref2 = _reference_nll(preds2, inds2, times2, bin_boundaries)
    assert np.allclose(np.asarray(loss2), np.asarray(ref2),
                       rtol=1e-5, atol=1e-5), (loss2, ref2)

    # --- Test 3: forced multi-tile grid (exercises parallel per-tile partials
    # and last-tile-only masking). ---
    loss3 = jax.block_until_ready(
        discrete_failure_time_nll(preds2, inds2, times2, bin_boundaries,
                                  block_rows=8))
    assert np.allclose(np.asarray(loss3), np.asarray(ref2),
                       rtol=1e-5, atol=1e-5), (loss3, ref2)

    print("KERNEL_OK")
</pallas_src>

<mosaic_0001>
module attributes {stable_mosaic.version = 11 : i64} {
  func.func @kernel(%arg0: i32, %arg1: memref<2x8xf32, #tpu.memory_space<smem>>, %arg2: memref<8x8x128xf32, #tpu.memory_space<vmem>>, %arg3: memref<8x128xf32, #tpu.memory_space<vmem>>, %arg4: memref<8x128xf32, #tpu.memory_space<vmem>>, %arg5: memref<1x1x128xf32, #tpu.memory_space<vmem>>) attributes {dimension_semantics = [#tpu.dimension_semantics<parallel>], iteration_bounds = array<i64: 1>, scalar_prefetch = 0 : i64, scratch_operands = 0 : i64, tpu.core_type = #tpu.core_type<tc>, window_params = [{transform_indices = @transform_0, window_bounds = array<i64: 2, 8>}, {transform_indices = @transform_1, window_bounds = array<i64: 8, 8, 128>}, {transform_indices = @transform_2, window_bounds = array<i64: 8, 128>}, {transform_indices = @transform_3, window_bounds = array<i64: 8, 128>}, {transform_indices = @transform_4, window_bounds = array<i64: 1, 1, 128>}]} {
    %c0 = arith.constant 0 : index
    %c0_0 = arith.constant 0 : index
    %0 = vector.load %arg3[%c0, %c0_0] : memref<8x128xf32, #tpu.memory_space<vmem>>, vector<8x128xf32>
    %c0_1 = arith.constant 0 : index
    %c0_2 = arith.constant 0 : index
    %1 = vector.load %arg4[%c0_1, %c0_2] : memref<8x128xf32, #tpu.memory_space<vmem>>, vector<8x128xf32>
    %cst = arith.constant 0.000000e+00 : f32
    %2 = vector.broadcast %cst : f32 to vector<8x128xf32>
    %cst_3 = arith.constant 0.000000e+00 : f32
    %3 = vector.broadcast %cst_3 : f32 to vector<8x128xf32>
    %c0_4 = arith.constant 0 : index
    %c0_5 = arith.constant 0 : index
    %c0_6 = arith.constant 0 : index
    %4 = vector.load %arg2[%c0_4, %c0_5, %c0_6] : memref<8x8x128xf32, #tpu.memory_space<vmem>>, vector<1x8x128xf32>
    %5 = vector.shape_cast %4 : vector<1x8x128xf32> to vector<8x128xf32>
    %cst_7 = arith.constant 1.000000e-07 : f32
    %cst_8 = arith.constant 0.99999988 : f32
    %6 = vector.broadcast %cst_7 : f32 to vector<8x128xf32>
    %7 = arith.maximumf %6, %5 : vector<8x128xf32>
    %8 = vector.broadcast %cst_8 : f32 to vector<8x128xf32>
    %9 = arith.minimumf %8, %7 : vector<8x128xf32>
    %c0_9 = arith.constant 0 : index
    %c0_10 = arith.constant 0 : index
    %10 = memref.load %arg1[%c0_9, %c0_10] : memref<2x8xf32, #tpu.memory_space<smem>>
    %c1 = arith.constant 1 : index
    %c0_11 = arith.constant 0 : index
    %11 = memref.load %arg1[%c1, %c0_11] : memref<2x8xf32, #tpu.memory_space<smem>>
    %12 = vector.broadcast %10 : f32 to vector<8x128xf32>
    %13 = arith.subf %0, %12 : vector<8x128xf32>
    %14 = vector.broadcast %11 : f32 to vector<8x128xf32>
    %15 = arith.mulf %13, %14 : vector<8x128xf32>
    %cst_12 = arith.constant 0.000000e+00 : f32
    %16 = vector.broadcast %cst_12 : f32 to vector<8x128xf32>
    %17 = arith.cmpf ogt, %15, %16 : vector<8x128xf32>
    %cst_13 = arith.constant 1.000000e+00 : f32
    %18 = vector.broadcast %cst_13 : f32 to vector<8x128xf32>
    %19 = arith.cmpf ole, %15, %18 : vector<8x128xf32>
    %20 = arith.andi %17, %19 : vector<8x128xi1>
    %cst_14 = arith.constant 0.000000e+00 : f32
    %21 = vector.broadcast %cst_14 : f32 to vector<8x128xf32>
    %22 = arith.select %20, %9, %21 : vector<8x128xi1>, vector<8x128xf32>
    %23 = arith.addf %2, %22 : vector<8x128xf32>
    %cst_15 = arith.constant 0.000000e+00 : f32
    %cst_16 = arith.constant 1.000000e+00 : f32
    %24 = vector.broadcast %cst_15 : f32 to vector<8x128xf32>
    %25 = arith.maximumf %24, %15 : vector<8x128xf32>
    %26 = vector.broadcast %cst_16 : f32 to vector<8x128xf32>
    %27 = arith.minimumf %26, %25 : vector<8x128xf32>
    %28 = arith.mulf %27, %9 : vector<8x128xf32>
    %29 = arith.addf %3, %28 : vector<8x128xf32>
    %c1_17 = arith.constant 1 : index
    %c0_18 = arith.constant 0 : index
    %c0_19 = arith.constant 0 : index
    %30 = vector.load %arg2[%c1_17, %c0_18, %c0_19] : memref<8x8x128xf32, #tpu.memory_space<vmem>>, vector<1x8x128xf32>
    %31 = vector.shape_cast %30 : vector<1x8x128xf32> to vector<8x128xf32>
    %cst_20 = arith.constant 1.000000e-07 : f32
    %cst_21 = arith.constant 0.99999988 : f32
    %32 = vector.broadcast %cst_20 : f32 to vector<8x128xf32>
    %33 = arith.maximumf %32, %31 : vector<8x128xf32>
    %34 = vector.broadcast %cst_21 : f32 to vector<8x128xf32>
    %35 = arith.minimumf %34, %33 : vector<8x128xf32>
    %c0_22 = arith.constant 0 : index
    %c1_23 = arith.constant 1 : index
    %36 = memref.load %arg1[%c0_22, %c1_23] : memref<2x8xf32, #tpu.memory_space<smem>>
    %c1_24 = arith.constant 1 : index
    %c1_25 = arith.constant 1 : index
    %37 = memref.load %arg1[%c1_24, %c1_25] : memref<2x8xf32, #tpu.memory_space<smem>>
    %38 = vector.broadcast %36 : f32 to vector<8x128xf32>
    %39 = arith.subf %0, %38 : vector<8x128xf32>
    %40 = vector.broadcast %37 : f32 to vector<8x128xf32>
    %41 = arith.mulf %39, %40 : vector<8x128xf32>
    %cst_26 = arith.constant 0.000000e+00 : f32
    %42 = vector.broadcast %cst_26 : f32 to vector<8x128xf32>
    %43 = arith.cmpf ogt, %41, %42 : vector<8x128xf32>
    %cst_27 = arith.constant 1.000000e+00 : f32
    %44 = vector.broadcast %cst_27 : f32 to vector<8x128xf32>
    %45 = arith.cmpf ole, %41, %44 : vector<8x128xf32>
    %46 = arith.andi %43, %45 : vector<8x128xi1>
    %cst_28 = arith.constant 0.000000e+00 : f32
    %47 = vector.broadcast %cst_28 : f32 to vector<8x128xf32>
    %48 = arith.select %46, %35, %47 : vector<8x128xi1>, vector<8x128xf32>
    %49 = arith.addf %23, %48 : vector<8x128xf32>
    %cst_29 = arith.constant 0.000000e+00 : f32
    %cst_30 = arith.constant 1.000000e+00 : f32
    %50 = vector.broadcast %cst_29 : f32 to vector<8x128xf32>
    %51 = arith.maximumf %50, %41 : vector<8x128xf32>
    %52 = vector.broadcast %cst_30 : f32 to vector<8x128xf32>
    %53 = arith.minimumf %52, %51 : vector<8x128xf32>
    %54 = arith.mulf %53, %35 : vector<8x128xf32>
    %55 = arith.addf %29, %54 : vector<8x128xf32>
    %c2 = arith.constant 2 : index
    %c0_31 = arith.constant 0 : index
    %c0_32 = arith.constant 0 : index
    %56 = vector.load %arg2[%c2, %c0_31, %c0_32] : memref<8x8x128xf32, #tpu.memory_space<vmem>>, vector<1x8x128xf32>
    %57 = vector.shape_cast %56 : vector<1x8x128xf32> to vector<8x128xf32>
    %cst_33 = arith.constant 1.000000e-07 : f32
    %cst_34 = arith.constant 0.99999988 : f32
    %58 = vector.broadcast %cst_33 : f32 to vector<8x128xf32>
    %59 = arith.maximumf %58, %57 : vector<8x128xf32>
    %60 = vector.broadcast %cst_34 : f32 to vector<8x128xf32>
    %61 = arith.minimumf %60, %59 : vector<8x128xf32>
    %c0_35 = arith.constant 0 : index
    %c2_36 = arith.constant 2 : index
    %62 = memref.load %arg1[%c0_35, %c2_36] : memref<2x8xf32, #tpu.memory_space<smem>>
    %c1_37 = arith.constant 1 : index
    %c2_38 = arith.constant 2 : index
    %63 = memref.load %arg1[%c1_37, %c2_38] : memref<2x8xf32, #tpu.memory_space<smem>>
    %64 = vector.broadcast %62 : f32 to vector<8x128xf32>
    %65 = arith.subf %0, %64 : vector<8x128xf32>
    %66 = vector.broadcast %63 : f32 to vector<8x128xf32>
    %67 = arith.mulf %65, %66 : vector<8x128xf32>
    %cst_39 = arith.constant 0.000000e+00 : f32
    %68 = vector.broadcast %cst_39 : f32 to vector<8x128xf32>
    %69 = arith.cmpf ogt, %67, %68 : vector<8x128xf32>
    %cst_40 = arith.constant 1.000000e+00 : f32
    %70 = vector.broadcast %cst_40 : f32 to vector<8x128xf32>
    %71 = arith.cmpf ole, %67, %70 : vector<8x128xf32>
    %72 = arith.andi %69, %71 : vector<8x128xi1>
    %cst_41 = arith.constant 0.000000e+00 : f32
    %73 = vector.broadcast %cst_41 : f32 to vector<8x128xf32>
    %74 = arith.select %72, %61, %73 : vector<8x128xi1>, vector<8x128xf32>
    %75 = arith.addf %49, %74 : vector<8x128xf32>
    %cst_42 = arith.constant 0.000000e+00 : f32
    %cst_43 = arith.constant 1.000000e+00 : f32
    %76 = vector.broadcast %cst_42 : f32 to vector<8x128xf32>
    %77 = arith.maximumf %76, %67 : vector<8x128xf32>
    %78 = vector.broadcast %cst_43 : f32 to vector<8x128xf32>
    %79 = arith.minimumf %78, %77 : vector<8x128xf32>
    %80 = arith.mulf %79, %61 : vector<8x128xf32>
    %81 = arith.addf %55, %80 : vector<8x128xf32>
    %c3 = arith.constant 3 : index
    %c0_44 = arith.constant 0 : index
    %c0_45 = arith.constant 0 : index
    %82 = vector.load %arg2[%c3, %c0_44, %c0_45] : memref<8x8x128xf32, #tpu.memory_space<vmem>>, vector<1x8x128xf32>
    %83 = vector.shape_cast %82 : vector<1x8x128xf32> to vector<8x128xf32>
    %cst_46 = arith.constant 1.000000e-07 : f32
    %cst_47 = arith.constant 0.99999988 : f32
    %84 = vector.broadcast %cst_46 : f32 to vector<8x128xf32>
    %85 = arith.maximumf %84, %83 : vector<8x128xf32>
    %86 = vector.broadcast %cst_47 : f32 to vector<8x128xf32>
    %87 = arith.minimumf %86, %85 : vector<8x128xf32>
    %c0_48 = arith.constant 0 : index
    %c3_49 = arith.constant 3 : index
    %88 = memref.load %arg1[%c0_48, %c3_49] : memref<2x8xf32, #tpu.memory_space<smem>>
    %c1_50 = arith.constant 1 : index
    %c3_51 = arith.constant 3 : index
    %89 = memref.load %arg1[%c1_50, %c3_51] : memref<2x8xf32, #tpu.memory_space<smem>>
    %90 = vector.broadcast %88 : f32 to vector<8x128xf32>
    %91 = arith.subf %0, %90 : vector<8x128xf32>
    %92 = vector.broadcast %89 : f32 to vector<8x128xf32>
    %93 = arith.mulf %91, %92 : vector<8x128xf32>
    %cst_52 = arith.constant 0.000000e+00 : f32
    %94 = vector.broadcast %cst_52 : f32 to vector<8x128xf32>
    %95 = arith.cmpf ogt, %93, %94 : vector<8x128xf32>
    %cst_53 = arith.constant 1.000000e+00 : f32
    %96 = vector.broadcast %cst_53 : f32 to vector<8x128xf32>
    %97 = arith.cmpf ole, %93, %96 : vector<8x128xf32>
    %98 = arith.andi %95, %97 : vector<8x128xi1>
    %cst_54 = arith.constant 0.000000e+00 : f32
    %99 = vector.broadcast %cst_54 : f32 to vector<8x128xf32>
    %100 = arith.select %98, %87, %99 : vector<8x128xi1>, vector<8x128xf32>
    %101 = arith.addf %75, %100 : vector<8x128xf32>
    %cst_55 = arith.constant 0.000000e+00 : f32
    %cst_56 = arith.constant 1.000000e+00 : f32
    %102 = vector.broadcast %cst_55 : f32 to vector<8x128xf32>
    %103 = arith.maximumf %102, %93 : vector<8x128xf32>
    %104 = vector.broadcast %cst_56 : f32 to vector<8x128xf32>
    %105 = arith.minimumf %104, %103 : vector<8x128xf32>
    %106 = arith.mulf %105, %87 : vector<8x128xf32>
    %107 = arith.addf %81, %106 : vector<8x128xf32>
    %c4 = arith.constant 4 : index
    %c0_57 = arith.constant 0 : index
    %c0_58 = arith.constant 0 : index
    %108 = vector.load %arg2[%c4, %c0_57, %c0_58] : memref<8x8x128xf32, #tpu.memory_space<vmem>>, vector<1x8x128xf32>
    %109 = vector.shape_cast %108 : vector<1x8x128xf32> to vector<8x128xf32>
    %cst_59 = arith.constant 1.000000e-07 : f32
    %cst_60 = arith.constant 0.99999988 : f32
    %110 = vector.broadcast %cst_59 : f32 to vector<8x128xf32>
    %111 = arith.maximumf %110, %109 : vector<8x128xf32>
    %112 = vector.broadcast %cst_60 : f32 to vector<8x128xf32>
    %113 = arith.minimumf %112, %111 : vector<8x128xf32>
    %c0_61 = arith.constant 0 : index
    %c4_62 = arith.constant 4 : index
    %114 = memref.load %arg1[%c0_61, %c4_62] : memref<2x8xf32, #tpu.memory_space<smem>>
    %c1_63 = arith.constant 1 : index
    %c4_64 = arith.constant 4 : index
    %115 = memref.load %arg1[%c1_63, %c4_64] : memref<2x8xf32, #tpu.memory_space<smem>>
    %116 = vector.broadcast %114 : f32 to vector<8x128xf32>
    %117 = arith.subf %0, %116 : vector<8x128xf32>
    %118 = vector.broadcast %115 : f32 to vector<8x128xf32>
    %119 = arith.mulf %117, %118 : vector<8x128xf32>
    %cst_65 = arith.constant 0.000000e+00 : f32
    %120 = vector.broadcast %cst_65 : f32 to vector<8x128xf32>
    %121 = arith.cmpf ogt, %119, %120 : vector<8x128xf32>
    %cst_66 = arith.constant 1.000000e+00 : f32
    %122 = vector.broadcast %cst_66 : f32 to vector<8x128xf32>
    %123 = arith.cmpf ole, %119, %122 : vector<8x128xf32>
    %124 = arith.andi %121, %123 : vector<8x128xi1>
    %cst_67 = arith.constant 0.000000e+00 : f32
    %125 = vector.broadcast %cst_67 : f32 to vector<8x128xf32>
    %126 = arith.select %124, %113, %125 : vector<8x128xi1>, vector<8x128xf32>
    %127 = arith.addf %101, %126 : vector<8x128xf32>
    %cst_68 = arith.constant 0.000000e+00 : f32
    %cst_69 = arith.constant 1.000000e+00 : f32
    %128 = vector.broadcast %cst_68 : f32 to vector<8x128xf32>
    %129 = arith.maximumf %128, %119 : vector<8x128xf32>
    %130 = vector.broadcast %cst_69 : f32 to vector<8x128xf32>
    %131 = arith.minimumf %130, %129 : vector<8x128xf32>
    %132 = arith.mulf %131, %113 : vector<8x128xf32>
    %133 = arith.addf %107, %132 : vector<8x128xf32>
    %c5 = arith.constant 5 : index
    %c0_70 = arith.constant 0 : index
    %c0_71 = arith.constant 0 : index
    %134 = vector.load %arg2[%c5, %c0_70, %c0_71] : memref<8x8x128xf32, #tpu.memory_space<vmem>>, vector<1x8x128xf32>
    %135 = vector.shape_cast %134 : vector<1x8x128xf32> to vector<8x128xf32>
    %cst_72 = arith.constant 1.000000e-07 : f32
    %cst_73 = arith.constant 0.99999988 : f32
    %136 = vector.broadcast %cst_72 : f32 to vector<8x128xf32>
    %137 = arith.maximumf %136, %135 : vector<8x128xf32>
    %138 = vector.broadcast %cst_73 : f32 to vector<8x128xf32>
    %139 = arith.minimumf %138, %137 : vector<8x128xf32>
    %c0_74 = arith.constant 0 : index
    %c5_75 = arith.constant 5 : index
    %140 = memref.load %arg1[%c0_74, %c5_75] : memref<2x8xf32, #tpu.memory_space<smem>>
    %c1_76 = arith.constant 1 : index
    %c5_77 = arith.constant 5 : index
    %141 = memref.load %arg1[%c1_76, %c5_77] : memref<2x8xf32, #tpu.memory_space<smem>>
    %142 = vector.broadcast %140 : f32 to vector<8x128xf32>
    %143 = arith.subf %0, %142 : vector<8x128xf32>
    %144 = vector.broadcast %141 : f32 to vector<8x128xf32>
    %145 = arith.mulf %143, %144 : vector<8x128xf32>
    %cst_78 = arith.constant 0.000000e+00 : f32
    %146 = vector.broadcast %cst_78 : f32 to vector<8x128xf32>
    %147 = arith.cmpf ogt, %145, %146 : vector<8x128xf32>
    %cst_79 = arith.constant 1.000000e+00 : f32
    %148 = vector.broadcast %cst_79 : f32 to vector<8x128xf32>
    %149 = arith.cmpf ole, %145, %148 : vector<8x128xf32>
    %150 = arith.andi %147, %149 : vector<8x128xi1>
    %cst_80 = arith.constant 0.000000e+00 : f32
    %151 = vector.broadcast %cst_80 : f32 to vector<8x128xf32>
    %152 = arith.select %150, %139, %151 : vector<8x128xi1>, vector<8x128xf32>
    %153 = arith.addf %127, %152 : vector<8x128xf32>
    %cst_81 = arith.constant 0.000000e+00 : f32
    %cst_82 = arith.constant 1.000000e+00 : f32
    %154 = vector.broadcast %cst_81 : f32 to vector<8x128xf32>
    %155 = arith.maximumf %154, %145 : vector<8x128xf32>
    %156 = vector.broadcast %cst_82 : f32 to vector<8x128xf32>
    %157 = arith.minimumf %156, %155 : vector<8x128xf32>
    %158 = arith.mulf %157, %139 : vector<8x128xf32>
    %159 = arith.addf %133, %158 : vector<8x128xf32>
    %c6 = arith.constant 6 : index
    %c0_83 = arith.constant 0 : index
    %c0_84 = arith.constant 0 : index
    %160 = vector.load %arg2[%c6, %c0_83, %c0_84] : memref<8x8x128xf32, #tpu.memory_space<vmem>>, vector<1x8x128xf32>
    %161 = vector.shape_cast %160 : vector<1x8x128xf32> to vector<8x128xf32>
    %cst_85 = arith.constant 1.000000e-07 : f32
    %cst_86 = arith.constant 0.99999988 : f32
    %162 = vector.broadcast %cst_85 : f32 to vector<8x128xf32>
    %163 = arith.maximumf %162, %161 : vector<8x128xf32>
    %164 = vector.broadcast %cst_86 : f32 to vector<8x128xf32>
    %165 = arith.minimumf %164, %163 : vector<8x128xf32>
    %c0_87 = arith.constant 0 : index
    %c6_88 = arith.constant 6 : index
    %166 = memref.load %arg1[%c0_87, %c6_88] : memref<2x8xf32, #tpu.memory_space<smem>>
    %c1_89 = arith.constant 1 : index
    %c6_90 = arith.constant 6 : index
    %167 = memref.load %arg1[%c1_89, %c6_90] : memref<2x8xf32, #tpu.memory_space<smem>>
    %168 = vector.broadcast %166 : f32 to vector<8x128xf32>
    %169 = arith.subf %0, %168 : vector<8x128xf32>
    %170 = vector.broadcast %167 : f32 to vector<8x128xf32>
    %171 = arith.mulf %169, %170 : vector<8x128xf32>
    %cst_91 = arith.constant 0.000000e+00 : f32
    %172 = vector.broadcast %cst_91 : f32 to vector<8x128xf32>
    %173 = arith.cmpf ogt, %171, %172 : vector<8x128xf32>
    %cst_92 = arith.constant 1.000000e+00 : f32
    %174 = vector.broadcast %cst_92 : f32 to vector<8x128xf32>
    %175 = arith.cmpf ole, %171, %174 : vector<8x128xf32>
    %176 = arith.andi %173, %175 : vector<8x128xi1>
    %cst_93 = arith.constant 0.000000e+00 : f32
    %177 = vector.broadcast %cst_93 : f32 to vector<8x128xf32>
    %178 = arith.select %176, %165, %177 : vector<8x128xi1>, vector<8x128xf32>
    %179 = arith.addf %153, %178 : vector<8x128xf32>
    %cst_94 = arith.constant 0.000000e+00 : f32
    %cst_95 = arith.constant 1.000000e+00 : f32
    %180 = vector.broadcast %cst_94 : f32 to vector<8x128xf32>
    %181 = arith.maximumf %180, %171 : vector<8x128xf32>
    %182 = vector.broadcast %cst_95 : f32 to vector<8x128xf32>
    %183 = arith.minimumf %182, %181 : vector<8x128xf32>
    %184 = arith.mulf %183, %165 : vector<8x128xf32>
    %185 = arith.addf %159, %184 : vector<8x128xf32>
    %c7 = arith.constant 7 : index
    %c0_96 = arith.constant 0 : index
    %c0_97 = arith.constant 0 : index
    %186 = vector.load %arg2[%c7, %c0_96, %c0_97] : memref<8x8x128xf32, #tpu.memory_space<vmem>>, vector<1x8x128xf32>
    %187 = vector.shape_cast %186 : vector<1x8x128xf32> to vector<8x128xf32>
    %cst_98 = arith.constant 1.000000e-07 : f32
    %cst_99 = arith.constant 0.99999988 : f32
    %188 = vector.broadcast %cst_98 : f32 to vector<8x128xf32>
    %189 = arith.maximumf %188, %187 : vector<8x128xf32>
    %190 = vector.broadcast %cst_99 : f32 to vector<8x128xf32>
    %191 = arith.minimumf %190, %189 : vector<8x128xf32>
    %c0_100 = arith.constant 0 : index
    %c7_101 = arith.constant 7 : index
    %192 = memref.load %arg1[%c0_100, %c7_101] : memref<2x8xf32, #tpu.memory_space<smem>>
    %c1_102 = arith.constant 1 : index
    %c7_103 = arith.constant 7 : index
    %193 = memref.load %arg1[%c1_102, %c7_103] : memref<2x8xf32, #tpu.memory_space<smem>>
    %194 = vector.broadcast %192 : f32 to vector<8x128xf32>
    %195 = arith.subf %0, %194 : vector<8x128xf32>
    %196 = vector.broadcast %193 : f32 to vector<8x128xf32>
    %197 = arith.mulf %195, %196 : vector<8x128xf32>
    %cst_104 = arith.constant 0.000000e+00 : f32
    %198 = vector.broadcast %cst_104 : f32 to vector<8x128xf32>
    %199 = arith.cmpf ogt, %197, %198 : vector<8x128xf32>
    %cst_105 = arith.constant 1.000000e+00 : f32
    %200 = vector.broadcast %cst_105 : f32 to vector<8x128xf32>
    %201 = arith.cmpf ole, %197, %200 : vector<8x128xf32>
    %202 = arith.andi %199, %201 : vector<8x128xi1>
    %cst_106 = arith.constant 0.000000e+00 : f32
    %203 = vector.broadcast %cst_106 : f32 to vector<8x128xf32>
    %204 = arith.select %202, %191, %203 : vector<8x128xi1>, vector<8x128xf32>
    %205 = arith.addf %179, %204 : vector<8x128xf32>
    %cst_107 = arith.constant 0.000000e+00 : f32
    %cst_108 = arith.constant 1.000000e+00 : f32
    %206 = vector.broadcast %cst_107 : f32 to vector<8x128xf32>
    %207 = arith.maximumf %206, %197 : vector<8x128xf32>
    %208 = vector.broadcast %cst_108 : f32 to vector<8x128xf32>
    %209 = arith.minimumf %208, %207 : vector<8x128xf32>
    %210 = arith.mulf %209, %191 : vector<8x128xf32>
    %211 = arith.addf %185, %210 : vector<8x128xf32>
    %cst_109 = arith.constant 1.000000e-07 : f32
    %212 = vector.broadcast %cst_109 : f32 to vector<8x128xf32>
    %213 = arith.addf %205, %212 : vector<8x128xf32>
    %cst_110 = arith.constant 1.000000e-07 : f32
    %cst_111 = arith.constant 0.99999988 : f32
    %214 = vector.broadcast %cst_110 : f32 to vector<8x128xf32>
    %215 = arith.maximumf %214, %213 : vector<8x128xf32>
    %216 = vector.broadcast %cst_111 : f32 to vector<8x128xf32>
    %217 = arith.minimumf %216, %215 : vector<8x128xf32>
    %cst_112 = arith.constant 1.000000e+00 : f32
    %218 = vector.broadcast %cst_112 : f32 to vector<8x128xf32>
    %219 = arith.subf %218, %211 : vector<8x128xf32>
    %cst_113 = arith.constant 1.000000e-07 : f32
    %220 = vector.broadcast %cst_113 : f32 to vector<8x128xf32>
    %221 = arith.addf %219, %220 : vector<8x128xf32>
    %cst_114 = arith.constant 1.000000e-07 : f32
    %cst_115 = arith.constant 0.99999988 : f32
    %222 = vector.broadcast %cst_114 : f32 to vector<8x128xf32>
    %223 = arith.maximumf %222, %221 : vector<8x128xf32>
    %224 = vector.broadcast %cst_115 : f32 to vector<8x128xf32>
    %225 = arith.minimumf %224, %223 : vector<8x128xf32>
    %226 = math.log %217 : vector<8x128xf32>
    %227 = arith.mulf %1, %226 : vector<8x128xf32>
    %cst_116 = arith.constant 1.000000e+00 : f32
    %228 = vector.broadcast %cst_116 : f32 to vector<8x128xf32>
    %229 = arith.subf %228, %1 : vector<8x128xf32>
    %230 = math.log %225 : vector<8x128xf32>
    %231 = arith.mulf %229, %230 : vector<8x128xf32>
    %232 = arith.addf %227, %231 : vector<8x128xf32>
    %c0_i32 = arith.constant 0 : i32
    %233 = arith.cmpi ne, %arg0, %c0_i32 : i32
    %234 = arith.extui %233 : i1 to i32
    %c0_i32_117 = arith.constant 0 : i32
    %235 = arith.cmpi ne, %234, %c0_i32_117 : i32
    scf.if %235 {
      %cst_120 = arith.constant dense<0.000000e+00> : vector<128xf32>
      %239 = vector.multi_reduction <add>, %232, %cst_120 [0] : vector<8x128xf32> to vector<128xf32>
      %240 = vector.shape_cast %239 : vector<128xf32> to vector<1x1x128xf32>
      %c0_121 = arith.constant 0 : index
      %c0_122 = arith.constant 0 : index
      %c0_123 = arith.constant 0 : index
      %241 = vector.load %arg5[%c0_121, %c0_122, %c0_123] : memref<1x1x128xf32, #tpu.memory_space<vmem>>, vector<1x1x128xf32>
      tpu.vector_store %arg5[%c0_121, %c0_122, %c0_123], %240 {strides = array<i32>} : memref<1x1x128xf32, #tpu.memory_space<vmem>>, vector<1x1x128xf32>,
    } else {
    }
    %c0_i32_118 = arith.constant 0 : i32
    %236 = arith.cmpi eq, %arg0, %c0_i32_118 : i32
    %237 = arith.extui %236 : i1 to i32
    %c0_i32_119 = arith.constant 0 : i32
    %238 = arith.cmpi ne, %237, %c0_i32_119 : i32
    scf.if %238 {
      %239 = tpu.iota {dimensions = array<i32: 0>} : vector<8x128xi32>
      %240 = tpu.iota {dimensions = array<i32: 1>} : vector<8x128xi32>
      %c8_i32 = arith.constant 8 : i32
      %241 = arith.muli %arg0, %c8_i32 : i32
      %242 = vector.broadcast %241 : i32 to vector<8x128xi32>
      %243 = arith.addi %242, %239 : vector<8x128xi32>
      %c128_i32 = arith.constant 128 : i32
      %244 = vector.broadcast %c128_i32 : i32 to vector<8x128xi32>
      %245 = arith.muli %243, %244 : vector<8x128xi32>
      %246 = arith.addi %245, %240 : vector<8x128xi32>
      %c8_i32_120 = arith.constant 8 : i32
      %247 = vector.broadcast %c8_i32_120 : i32 to vector<8x128xi32>
      %248 = arith.cmpi slt, %246, %247 : vector<8x128xi32>
      %cst_121 = arith.constant 0.000000e+00 : f32
      %249 = vector.broadcast %cst_121 : f32 to vector<8x128xf32>
      %250 = arith.select %248, %232, %249 : vector<8x128xi1>, vector<8x128xf32>
      %cst_122 = arith.constant dense<0.000000e+00> : vector<128xf32>
      %251 = vector.multi_reduction <add>, %250, %cst_122 [0] : vector<8x128xf32> to vector<128xf32>
      %252 = vector.shape_cast %251 : vector<128xf32> to vector<1x1x128xf32>
      %c0_123 = arith.constant 0 : index
      %c0_124 = arith.constant 0 : index
      %c0_125 = arith.constant 0 : index
      %253 = vector.load %arg5[%c0_123, %c0_124, %c0_125] : memref<1x1x128xf32, #tpu.memory_space<vmem>>, vector<1x1x128xf32>
      tpu.vector_store %arg5[%c0_123, %c0_124, %c0_125], %252 {strides = array<i32>} : memref<1x1x128xf32, #tpu.memory_space<vmem>>, vector<1x1x128xf32>,
    } else {
    }
    return
  }
  func.func @transform_0(%arg0: i32) -> (i32, i32) {
    %c0_i32 = arith.constant 0 : i32
    %c0_i32_0 = arith.constant 0 : i32
    %c0_i32_1 = arith.constant 0 : i32
    return %c0_i32, %c0_i32_0 : i32, i32
  }
  func.func @transform_1(%arg0: i32) -> (i32, i32, i32) {
    %c0_i32 = arith.constant 0 : i32
    %c0_i32_0 = arith.constant 0 : i32
    %c0_i32_1 = arith.constant 0 : i32
    return %c0_i32, %arg0, %c0_i32_0 : i32, i32, i32
  }
  func.func @transform_2(%arg0: i32) -> (i32, i32) {
    %c0_i32 = arith.constant 0 : i32
    %c0_i32_0 = arith.constant 0 : i32
    return %arg0, %c0_i32 : i32, i32
  }
  func.func @transform_3(%arg0: i32) -> (i32, i32) {
    %c0_i32 = arith.constant 0 : i32
    %c0_i32_0 = arith.constant 0 : i32
    return %arg0, %c0_i32 : i32, i32
  }
  func.func @transform_4(%arg0: i32) -> (i32, i32, i32) {
    %c0_i32 = arith.constant 0 : i32
    %c0_i32_0 = arith.constant 0 : i32
    %c0_i32_1 = arith.constant 0 : i32
    return %arg0, %c0_i32, %c0_i32_0 : i32, i32, i32
  }
}

</mosaic_0001>

<llo_original>
// kernel: tpu_custom_call.1
$region0: #{tpu_custom_call.1}
  #allocation0 [shape = 'u32[]', space=smem, size = 0x4, offset = 0x4, fixed_abs, tag = 'smem constant byte address 0x4 - core index']
  #allocation1 [shape = 'u32[144,128]{1,0:T(1,128)}', space=vmem, size = 0x12000, scoped, tag = 'internal scratch']
  %s0 = inlined_call_operand.hbm [shape: f32[2,8], index: 0, kind: input, shape index: {}]
  %s1 = inlined_call_operand.hbm [shape: f32[8,8,128], index: 1, kind: input, shape index: {}]
  %s2 = inlined_call_operand.hbm [shape: f32[8,128], index: 2, kind: input, shape index: {}]
  %s3 = inlined_call_operand.vmem [shape: f32[8,128], index: 3, kind: input, shape index: {}]
  %s4 = inlined_call_operand.hbm [shape: f32[1,1,128], index: 4, kind: output, shape index: {}]
  %s5 = sld [smem:[#allocation0]]
  $region46: #{tpu_custom_call.1} parent=0
    _
  %s7 = ssub.s32 1, %s5
  %s8 = scalar_select 0, %s7, %s5
  $region1: #{tpu_custom_call.1} parent=0
    #allocation2 [shape = 'u8[1024]{0}', space=smem, size = 0x400, scoped, tag = 'input window, operand 0, single buffered']
    #allocation3 [shape = 's32[1]{0}', space=sflag, size = 0x4, scoped, tag = 'scoped memory for tpu_custom_call.1']
    #allocation4 [shape = 's32[1]{0}', space=sflag, size = 0x4, scoped, tag = 'scoped memory for tpu_custom_call.1']
    #allocation5 [shape = 's32[1]{0}', space=sflag, size = 0x4, scoped, tag = 'scoped memory for tpu_custom_call.1']
    #allocation6 [shape = 'u8[32768]{0}', space=vmem, size = 0x8000, scoped, tag = 'input window, operand 1, single buffered']
    #allocation7 [shape = 'u8[4096]{0}', space=vmem, size = 0x1000, scoped, tag = 'input window, operand 2, single buffered']
    #allocation8 [shape = 's32[1]{0}', space=sflag, size = 0x4, scoped, tag = 'scoped memory for tpu_custom_call.1']
    #allocation9 [shape = 'u8[512]{0}', space=vmem, size = 0x400, scoped, tag = 'output window, operand 0, single buffered']
    %9 = vsyncpa [#allocation5], 0
    %10 = vsyncpa [#allocation3], 0
    %11 = vsyncpa [#allocation8], 0
    %12 = vsyncpa [#allocation4], 0
    // Predicated region
    $region2: #{tpu_custom_call.1} parent=1 // pred_check
      _
    $region3: #{tpu_custom_call.1} parent=1 // pred_check_branch
      %14 = sbr.rel (0) target = $region5
    $region4: #{tpu_custom_call.1} parent=1 // pred_region
      %s16 = ssub.s32 32, 32
      %17 = vsyncadd [#allocation5], %s16
      %20 = dma.hbm_to_smem %s0, 32, [#allocation2], [#allocation5]
    $region5: #{tpu_custom_call.1} parent=1 // pred_fallthru
      _
    // Predicated region
    $region6: #{tpu_custom_call.1} parent=1 // pred_check
      _
    $region7: #{tpu_custom_call.1} parent=1 // pred_check_branch
      %22 = sbr.rel (0) target = $region9
    $region8: #{tpu_custom_call.1} parent=1 // pred_region
      %s24 = ssub.s32 1024, 1024
      %25 = vsyncadd [#allocation3], %s24
      %s26 = sshll.u32 [#allocation6], 4
      %s27 = int_to_ptr.vmem [resolvable:$true] %s26
      %32 = dma.hbm_to_vmem [thread:$0]  %s1, 1024, %s27, [#allocation3], 128, 128, 8
    $region9: #{tpu_custom_call.1} parent=1 // pred_fallthru
      _
    // Predicated region
    $region10: #{tpu_custom_call.1} parent=1 // pred_check
      _
    $region11: #{tpu_custom_call.1} parent=1 // pred_check_branch
      %34 = sbr.rel (0) target = $region13
    $region12: #{tpu_custom_call.1} parent=1 // pred_region
      %s36 = ssub.s32 128, 128
      %37 = vsyncadd [#allocation8], %s36
      %s39 = sshll.u32 [#allocation7], 4
      %s40 = int_to_ptr.vmem [resolvable:$true] %s39
      %42 = dma.hbm_to_vmem [thread:$0]  %s2, 128, %s40, [#allocation8]
    $region13: #{tpu_custom_call.1} parent=1 // pred_fallthru
      _
    // Predicated region
    $region14: #{tpu_custom_call.1} parent=1 // pred_check
      _
    $region15: #{tpu_custom_call.1} parent=1 // pred_check_branch
      %44 = sbr.rel (0) target = $region17
    $region16: #{tpu_custom_call.1} parent=1 // pred_region
      _
    $region17: #{tpu_custom_call.1} parent=1 // pred_fallthru
      _
    // Predicated region
    $region18: #{tpu_custom_call.1} parent=1 // pred_check
      _
    $region19: #{tpu_custom_call.1} parent=1 // pred_check_branch
      %46 = sbr.rel (0) target = $region21
    $region20: #{tpu_custom_call.1} parent=1 // pred_region
      %47 = dma.done [#allocation5], 32
    $region21: #{tpu_custom_call.1} parent=1 // pred_fallthru
      _
    // Predicated region
    $region22: #{tpu_custom_call.1} parent=1 // pred_check
      _
    $region23: #{tpu_custom_call.1} parent=1 // pred_check_branch
      %49 = sbr.rel (0) target = $region25
    $region24: #{tpu_custom_call.1} parent=1 // pred_region
      %50 = dma.done [#allocation3], 1024
    $region25: #{tpu_custom_call.1} parent=1 // pred_fallthru
      _
    // Predicated region
    $region26: #{tpu_custom_call.1} parent=1 // pred_check
      _
    $region27: #{tpu_custom_call.1} parent=1 // pred_check_branch
      %52 = sbr.rel (0) target = $region29
    $region28: #{tpu_custom_call.1} parent=1 // pred_region
      %53 = dma.done [#allocation8], 128
    $region29: #{tpu_custom_call.1} parent=1 // pred_fallthru
      _
    %54 = sfence
    %v55 = vld [vmem:[#allocation7] sm:$0xff]
    %v56 = vld [vmem:[%s3] sm:$0xff]
    %v57 = vld [vmem:[#allocation6] sm:$0xff]
    %v58 = vmax.f32 %v57, 1e-07
    %v59 = vmin.f32 %v58, 0.9999999
    %s60 = sld [smem:[#allocation2]]
    %s61 = sld [smem:[#allocation2 + $0x80]]
    %v62 = vstv %s60
    %v63 = vsub.f32 %v55, %v62
    %v64 = vstv %s61
    %v65 = vmul.f32 %v63, %v64
    %vm66 = vcmp.gt.f32.partialorder %v65, 0.0
    %vm67 = vcmp.le.f32.partialorder %v65, 1.0
    %vm68 = vmand %vm66, %vm67
    %v69 = vsel %vm68, %v59, 0.0
    %v70 = vadd.f32 %v69, 0.0
    %v71 = vmax.f32 %v65, 0.0
    %v72 = vmin.f32 %v71, 1.0
    %v73 = vmul.f32 %v72, %v59
    %v74 = vadd.f32 %v73, 0.0
    %s75 = scalar_lea.vmem [#allocation6], 8
    %v76 = vld [vmem:[%s75] sm:$0xff]
    %v77 = vmax.f32 %v76, 1e-07
    %v78 = vmin.f32 %v77, 0.9999999
    %s79 = sld [smem:[#allocation2 + $0x1]]
    %s80 = sld [smem:[#allocation2 + $0x81]]
    %v81 = vstv %s79
    %v82 = vsub.f32 %v55, %v81
    %v83 = vstv %s80
    %v84 = vmul.f32 %v82, %v83
    %vm85 = vcmp.gt.f32.partialorder %v84, 0.0
    %vm86 = vcmp.le.f32.partialorder %v84, 1.0
    %vm87 = vmand %vm85, %vm86
    %v88 = vsel %vm87, %v78, 0.0
    %v89 = vadd.f32 %v70, %v88
    %v90 = vmax.f32 %v84, 0.0
    %v91 = vmin.f32 %v90, 1.0
    %v92 = vmul.f32 %v91, %v78
    %v93 = vadd.f32 %v74, %v92
    %s94 = scalar_lea.vmem [#allocation6], 16
    %v95 = vld [vmem:[%s94] sm:$0xff]
    %v96 = vmax.f32 %v95, 1e-07
    %v97 = vmin.f32 %v96, 0.9999999
    %s98 = sld [smem:[#allocation2 + $0x2]]
    %s99 = sld [smem:[#allocation2 + $0x82]]
    %v100 = vstv %s98
    %v101 = vsub.f32 %v55, %v100
    %v102 = vstv %s99
    %v103 = vmul.f32 %v101, %v102
    %vm104 = vcmp.gt.f32.partialorder %v103, 0.0
    %vm105 = vcmp.le.f32.partialorder %v103, 1.0
    %vm106 = vmand %vm104, %vm105
    %v107 = vsel %vm106, %v97, 0.0
    %v108 = vadd.f32 %v89, %v107
    %v109 = vmax.f32 %v103, 0.0
    %v110 = vmin.f32 %v109, 1.0
    %v111 = vmul.f32 %v110, %v97
    %v112 = vadd.f32 %v93, %v111
    %s113 = scalar_lea.vmem [#allocation6], 24
    %v114 = vld [vmem:[%s113] sm:$0xff]
    %v115 = vmax.f32 %v114, 1e-07
    %v116 = vmin.f32 %v115, 0.9999999
    %s117 = sld [smem:[#allocation2 + $0x3]]
    %s118 = sld [smem:[#allocation2 + $0x83]]
    %v119 = vstv %s117
    %v120 = vsub.f32 %v55, %v119
    %v121 = vstv %s118
    %v122 = vmul.f32 %v120, %v121
    %vm123 = vcmp.gt.f32.partialorder %v122, 0.0
    %vm124 = vcmp.le.f32.partialorder %v122, 1.0
    %vm125 = vmand %vm123, %vm124
    %v126 = vsel %vm125, %v116, 0.0
    %v127 = vadd.f32 %v108, %v126
    %v128 = vmax.f32 %v122, 0.0
    %v129 = vmin.f32 %v128, 1.0
    %v130 = vmul.f32 %v129, %v116
    %v131 = vadd.f32 %v112, %v130
    %s132 = scalar_lea.vmem [#allocation6], 32
    %v133 = vld [vmem:[%s132] sm:$0xff]
    %v134 = vmax.f32 %v133, 1e-07
    %v135 = vmin.f32 %v134, 0.9999999
    %s136 = sld [smem:[#allocation2 + $0x4]]
    %s137 = sld [smem:[#allocation2 + $0x84]]
    %v138 = vstv %s136
    %v139 = vsub.f32 %v55, %v138
    %v140 = vstv %s137
    %v141 = vmul.f32 %v139, %v140
    %vm142 = vcmp.gt.f32.partialorder %v141, 0.0
    %vm143 = vcmp.le.f32.partialorder %v141, 1.0
    %vm144 = vmand %vm142, %vm143
    %v145 = vsel %vm144, %v135, 0.0
    %v146 = vadd.f32 %v127, %v145
    %v147 = vmax.f32 %v141, 0.0
    %v148 = vmin.f32 %v147, 1.0
    %v149 = vmul.f32 %v148, %v135
    %v150 = vadd.f32 %v131, %v149
    %s151 = scalar_lea.vmem [#allocation6], 40
    %v152 = vld [vmem:[%s151] sm:$0xff]
    %v153 = vmax.f32 %v152, 1e-07
    %v154 = vmin.f32 %v153, 0.9999999
    %s155 = sld [smem:[#allocation2 + $0x5]]
    %s156 = sld [smem:[#allocation2 + $0x85]]
    %v157 = vstv %s155
    %v158 = vsub.f32 %v55, %v157
    %v159 = vstv %s156
    %v160 = vmul.f32 %v158, %v159
    %vm161 = vcmp.gt.f32.partialorder %v160, 0.0
    %vm162 = vcmp.le.f32.partialorder %v160, 1.0
    %vm163 = vmand %vm161, %vm162
    %v164 = vsel %vm163, %v154, 0.0
    %v165 = vadd.f32 %v146, %v164
    %v166 = vmax.f32 %v160, 0.0
    %v167 = vmin.f32 %v166, 1.0
    %v168 = vmul.f32 %v167, %v154
    %v169 = vadd.f32 %v150, %v168
    %s170 = scalar_lea.vmem [#allocation6], 48
    %v171 = vld [vmem:[%s170] sm:$0xff]
    %v172 = vmax.f32 %v171, 1e-07
    %v173 = vmin.f32 %v172, 0.9999999
    %s174 = sld [smem:[#allocation2 + $0x6]]
    %s175 = sld [smem:[#allocation2 + $0x86]]
    %v176 = vstv %s174
    %v177 = vsub.f32 %v55, %v176
    %v178 = vstv %s175
    %v179 = vmul.f32 %v177, %v178
    %vm180 = vcmp.gt.f32.partialorder %v179, 0.0
    %vm181 = vcmp.le.f32.partialorder %v179, 1.0
    %vm182 = vmand %vm180, %vm181
    %v183 = vsel %vm182, %v173, 0.0
    %v184 = vadd.f32 %v165, %v183
    %v185 = vmax.f32 %v179, 0.0
    %v186 = vmin.f32 %v185, 1.0
    %v187 = vmul.f32 %v186, %v173
    %v188 = vadd.f32 %v169, %v187
    %s189 = scalar_lea.vmem [#allocation6], 56
    %v190 = vld [vmem:[%s189] sm:$0xff]
    %v191 = vmax.f32 %v190, 1e-07
    %v192 = vmin.f32 %v191, 0.9999999
    %s193 = sld [smem:[#allocation2 + $0x7]]
    %s194 = sld [smem:[#allocation2 + $0x87]]
    %v195 = vstv %s193
    %v196 = vsub.f32 %v55, %v195
    %v197 = vstv %s194
    %v198 = vmul.f32 %v196, %v197
    %vm199 = vcmp.gt.f32.partialorder %v198, 0.0
    %vm200 = vcmp.le.f32.partialorder %v198, 1.0
    %vm201 = vmand %vm199, %vm200
    %v202 = vsel %vm201, %v192, 0.0
    %v203 = vadd.f32 %v184, %v202
    %v204 = vmax.f32 %v198, 0.0
    %v205 = vmin.f32 %v204, 1.0
    %v206 = vmul.f32 %v205, %v192
    %v207 = vadd.f32 %v188, %v206
    %v208 = vadd.f32 %v203, 1e-07
    %v209 = vmax.f32 %v208, 1e-07
    %v210 = vmin.f32 %v209, 0.9999999
    %v211 = vsub.f32 1.0, %v207
    %v212 = vadd.f32 %v211, 1e-07
    %v213 = vmax.f32 %v212, 1e-07
    %v214 = vmin.f32 %v213, 0.9999999
    %v215 = vlog2.pop %v210
    %v216 = vmul.f32 %v215, 0.6931472
    %v217 = vmul.f32 %v56, %v216
    %v218 = vsub.f32 1.0, %v56
    %v219 = vlog2.pop %v214
    %v220 = vmul.f32 %v219, 0.6931472
    %v221 = vmul.f32 %v218, %v220
    %v222 = vadd.f32 %v217, %v221
    %p223 = scmp.ne.s32.totalorder 0, 0
    // Predicated region
    $region30: #{tpu_custom_call.1} parent=1 // pred_check
      %p224 = pneg %p223
    $region31: #{tpu_custom_call.1} parent=1 // pred_check_branch
      %226 = sbr.rel (%p224) target = $region33
    $region32: #{tpu_custom_call.1} parent=1 // pred_region
      %v227 = vrot.slane %v222, 4
      %v228 = vadd.f32 %v222, %v227
      %v229 = vrot.slane %v228, 2
      %v230 = vadd.f32 %v228, %v229
      %v231 = vrot.slane %v230, 1
      %v232 = vadd.f32 %v230, %v231
      %233 = vst [vmem:[#allocation9] sm:$0x1] %v232
    $region33: #{tpu_custom_call.1} parent=1 // pred_fallthru
      _
    %p234 = scmp.eq.s32.totalorder 0, 0
    // Predicated region
    $region34: #{tpu_custom_call.1} parent=1 // pred_check
      %p235 = pneg %p234
    $region35: #{tpu_custom_call.1} parent=1 // pred_check_branch
      %237 = sbr.rel (%p235) target = $region37
    $region36: #{tpu_custom_call.1} parent=1 // pred_region
      %v238 = vlaneseq
      %v239 = vshrl.u32 %v238, 7
      %v240 = vlaneseq
      %v241 = vand.u32 %v240, 127
      %s242 = smul.u32 0, 8
      %v243 = vstv %s242
      %v244 = vadd.s32 %v243, %v239
      %v245 = vmul.u32 %v244, 128
      %v246 = vadd.s32 %v245, %v241
      %vm247 = vcmp.lt.s32.totalorder %v246, 8
      %v248 = vsel %vm247, %v222, 0.0
      %v249 = vrot.slane %v248, 4
      %v250 = vadd.f32 %v248, %v249
      %v251 = vrot.slane %v250, 2
      %v252 = vadd.f32 %v250, %v251
      %v253 = vrot.slane %v252, 1
      %v254 = vadd.f32 %v252, %v253
      %255 = vst [vmem:[#allocation9] sm:$0x1] %v254
    $region37: #{tpu_custom_call.1} parent=1 // pred_fallthru
      _
    // Predicated region
    $region38: #{tpu_custom_call.1} parent=1 // pred_check
      _
    $region39: #{tpu_custom_call.1} parent=1 // pred_check_branch
      %257 = sbr.rel (0) target = $region41
    $region40: #{tpu_custom_call.1} parent=1 // pred_region
      %s259 = ssub.s32 16, 16
      %260 = vsyncadd [#allocation4], %s259
      %s262 = sshll.u32 [#allocation9], 4
      %s263 = int_to_ptr.vmem [resolvable:$true] %s262
      %265 = dma.vmem_to_hbm [thread:$0]  %s263, 16, %s4, [#allocation4]
    $region41: #{tpu_custom_call.1} parent=1 // pred_fallthru
      _
    // Predicated region
    $region42: #{tpu_custom_call.1} parent=1 // pred_check
      _
    $region43: #{tpu_custom_call.1} parent=1 // pred_check_branch
      %267 = sbr.rel (0) target = $region45
    $region44: #{tpu_custom_call.1} parent=1 // pred_region
      %268 = dma.done [#allocation4], 16
    $region45: #{tpu_custom_call.1} parent=1 // pred_fallthru
      _
    %269 = vsyncpa [#allocation3], 1
    %270 = vsyncpa [#allocation8], 1
    %271 = vsyncpa [#allocation4], 1
    %272 = vsyncpa [#allocation5], 1

</llo_original>
